<compile_context>
chip_gen: v5e
topology: v5e:2x2
jax: 0.10.0
libtpu: 0.0.40
codegen_flags: <defaults>
</compile_context>

<pallas_src>
import jax
import jax.numpy as jnp
import numpy as np
from jax.experimental import pallas as pl
from jax.experimental.pallas import tpu as pltpu


_SUBLANE = 8
_NEG_BIG = -1e30   # bias for padded classes -> exp underflows to exactly 0


def _round_up(x, m):
    return (x + m - 1) // m * m


def _cdiv(a, b):
    return (a + b - 1) // b


def _stump_softmax_kernel(x_ref, sel_ref, thr_ref, leaf_ref, bias_ref, out_ref):
    # x_ref    : (TN, D)  f32  RoBERTa embedding tile
    # sel_ref  : (D,  T)  f32  one-hot column-select matrix (one 1.0 per column)
    # thr_ref  : (1,  T)  f32  split threshold per tree
    # leaf_ref : (T,  Cp) f32  folded leaf matrix (left - right); zero pad classes
    # bias_ref : (1,  Cp) f32  folded bias (base + sum right); -1e30 pad classes
    # out_ref  : (TN, Cp) f32  class probabilities (padded classes exactly 0)

    # In-kernel feature gather via one-hot MXU matmul: each sel column has a
    # single 1.0, so feat[n, t] == x[n, feat_idx[t]] (no separate gather op,
    # no feat intermediate round-tripping HBM).
    feat = jnp.dot(x_ref[...], sel_ref[...],
                   preferred_element_type=jnp.float32)                    # (TN, T)

    # Depth-1 stump decision (XGBoost: go left iff feature < threshold).
    mask = (feat < thr_ref[...]).astype(jnp.float32)                      # (TN, T)

    # Single folded MXU matmul for the class margins.
    logits = bias_ref[...] + jnp.dot(
        mask, leaf_ref[...], preferred_element_type=jnp.float32)          # (TN, Cp)

    # Softmax over classes; pad classes carry a -1e30 bias so e == 0 there.
    m = jnp.max(logits, axis=-1, keepdims=True)
    e = jnp.exp(logits - m)
    denom = jnp.sum(e, axis=-1, keepdims=True)
    # Exact divide: kernel is HBM-bound, so the approx EUP reciprocal buys
    # no wall-clock and the exact divide tightens numerics for free.
    out_ref[...] = (e / denom).astype(out_ref.dtype)


def gbt_predict_proba(x, feat_idx, thr, leaf_left, leaf_right, base,
                      *, tile_n=4096):
    """predict_proba of a depth-1 GBT ensemble via a single fused Pallas kernel."""
    x = x.astype(jnp.float32)
    N, D = x.shape
    T = int(thr.shape[-1])
    C = int(leaf_left.shape[1])

    # Pad classes only to the sublane multiple (8), not to 128 lanes:
    # block last dim == full array dim is legal and the (Np, 8) f32 output is
    # ~16x fewer HBM write bytes than an (Np, 128) one.
    Cp = _round_up(C, _SUBLANE)

    # Balanced batch tiles (no nearly-empty trailing tile); give the parallel
    # grid axis at least 2 steps when there is enough work (v7x has 2 TCs).
    n_tiles = max(1, _cdiv(N, tile_n))
    if n_tiles == 1 and N >= 2048:
        n_tiles = 2
    TN = _round_up(_cdiv(N, n_tiles), _SUBLANE)
    Np = TN * n_tiles

    x_p = jnp.pad(x, ((0, Np - N), (0, 0)))

    # One-hot select matrix (static indices, built host-side): fuses the
    # per-tree feature gather into the kernel's first MXU matmul.
    feat_idx = np.asarray(feat_idx, dtype=np.int64)
    sel = np.zeros((D, T), dtype=np.float32)
    sel[feat_idx, np.arange(T)] = 1.0
    sel = jnp.asarray(sel)

    thr_p = jnp.reshape(thr, (1, T)).astype(jnp.float32)

    # Fold the two leaf matmuls into one:
    #   mask@LL + (1-mask)@LR == mask@(LL-LR) + sum(LR, 0)
    leaf = jnp.pad((leaf_left - leaf_right).astype(jnp.float32),
                   ((0, 0), (0, Cp - C)))
    bias = (jnp.reshape(base, (1, C)).astype(jnp.float32)
            + jnp.sum(leaf_right, axis=0, keepdims=True).astype(jnp.float32))
    bias = jnp.pad(bias, ((0, 0), (0, Cp - C)), constant_values=_NEG_BIG)

    cost = pl.CostEstimate(
        flops=2 * Np * D * T + 2 * Np * T * Cp + 6 * Np * Cp,
        transcendentals=Np * Cp,
        bytes_accessed=4 * (Np * D + D * T + T + T * Cp + Cp + Np * Cp),
    )

    out = pl.pallas_call(
        _stump_softmax_kernel,
        out_shape=jax.ShapeDtypeStruct((Np, Cp), jnp.float32),
        grid=(n_tiles,),
        in_specs=[
            pl.BlockSpec((TN, D), lambda i: (i, 0)),   # x tile (last dim 768 % 128 == 0)
            pl.BlockSpec((D, T), lambda i: (0, 0)),    # one-hot select (full array)
            pl.BlockSpec((1, T), lambda i: (0, 0)),    # thresholds (full array)
            pl.BlockSpec((T, Cp), lambda i: (0, 0)),   # folded leaves (full array)
            pl.BlockSpec((1, Cp), lambda i: (0, 0)),   # folded bias (full array)
        ],
        out_specs=pl.BlockSpec((TN, Cp), lambda i: (i, 0)),
        compiler_params=pltpu.CompilerParams(
            dimension_semantics=("parallel",),
            # TN=4096 f32 x-tile double-buffered (~24 MiB) + intermediates fits
            # with headroom; above v5e's 16 MiB default, inside v7x's 64 MiB.
            vmem_limit_bytes=48 * 1024 * 1024),
        cost_estimate=cost,
    )(x_p, sel, thr_p, leaf, bias)

    return out[:N, :C]


def make_params(D=768, T=64, C=3, seed=0):
    """Deterministic synthetic depth-1 boosted-tree ensemble parameters."""
    # TODO(synk): the real Concrete-ML/XGBoost checkpoint (serialized_model_zkml)
    # and its FHE ('execute') path cannot be loaded here; parameters are
    # synthetic and base is treated as a margin-space offset.
    rng = np.random.RandomState(seed)

    feat_idx = rng.randint(0, D, size=(T,)).astype(np.int32)   # split feature/tree
    thr = rng.uniform(-0.5, 0.5, size=(1, T)).astype(np.float32)

    # Each tree boosts exactly one class (round-robin), like multiclass XGBoost.
    tree_class = np.arange(T) % C
    left_vals = rng.uniform(-0.4, 0.4, size=(T,)).astype(np.float32)
    right_vals = rng.uniform(-0.4, 0.4, size=(T,)).astype(np.float32)
    leaf_left = np.zeros((T, C), dtype=np.float32)
    leaf_right = np.zeros((T, C), dtype=np.float32)
    leaf_left[np.arange(T), tree_class] = left_vals
    leaf_right[np.arange(T), tree_class] = right_vals

    base = np.full((1, C), 0.5, dtype=np.float32)

    return (feat_idx, jnp.asarray(thr), jnp.asarray(leaf_left),
            jnp.asarray(leaf_right), jnp.asarray(base))


def aiwords_forward(x, params):
    """Equivalent of AIWordsModel.forward: predict_proba + squeeze."""
    feat_idx, thr, ll, lr, base = params
    probs = gbt_predict_proba(x, feat_idx, thr, ll, lr, base)
    # Matches torch .squeeze() (note: with N == 1 this also drops the batch axis).
    return jnp.squeeze(probs)


def _reference(x, params):
    """Pure-JAX reference of the UNFOLDED ensemble math."""
    feat_idx, thr, ll, lr, base = params
    feat = x[:, np.asarray(feat_idx)]
    mask = (feat < thr).astype(jnp.float32)
    logits = base + mask @ ll + (1.0 - mask) @ lr
    return jax.nn.softmax(logits, axis=-1)


if __name__ == "__main__":
    N, D, T, C = 8, 768, 64, 3   # 8 tweets, RoBERTa hidden=768, 64 stumps, 3 classes

    key = jax.random.PRNGKey(0)
    x = jax.random.normal(key, (N, D), dtype=jnp.float32)

    params = make_params(D=D, T=T, C=C, seed=0)

    out = aiwords_forward(x, params)
    out = jax.block_until_ready(out)

    ref = jnp.squeeze(_reference(x, params))
    assert out.shape == (N, C)
    np.testing.assert_allclose(np.asarray(out), np.asarray(ref),
                               rtol=1e-2, atol=1e-2)
    np.testing.assert_allclose(np.asarray(out).sum(axis=-1),
                               np.ones(N), rtol=1e-2, atol=1e-2)

    print("KERNEL_OK")
</pallas_src>

<mosaic_0001>
module attributes {stable_mosaic.version = 11 : i64} {
  func.func @_stump_softmax_kernel(%arg0: i32, %arg1: memref<8x768xf32, #tpu.memory_space<vmem>>, %arg2: memref<768x64xf32, #tpu.memory_space<vmem>>, %arg3: memref<1x64xf32, #tpu.memory_space<vmem>>, %arg4: memref<64x8xf32, #tpu.memory_space<vmem>>, %arg5: memref<1x8xf32, #tpu.memory_space<vmem>>, %arg6: memref<8x8xf32, #tpu.memory_space<vmem>>) attributes {dimension_semantics = [#tpu.dimension_semantics<parallel>], iteration_bounds = array<i64: 1>, scalar_prefetch = 0 : i64, scratch_operands = 0 : i64, tpu.core_type = #tpu.core_type<tc>, window_params = [{transform_indices = @transform_0, window_bounds = array<i64: 8, 768>}, {pipeline_mode = #tpu.pipeline_mode<synchronous>, transform_indices = @transform_1, window_bounds = array<i64: 768, 64>}, {pipeline_mode = #tpu.pipeline_mode<synchronous>, transform_indices = @transform_2, window_bounds = array<i64: 1, 64>}, {pipeline_mode = #tpu.pipeline_mode<synchronous>, transform_indices = @transform_3, window_bounds = array<i64: 64, 8>}, {pipeline_mode = #tpu.pipeline_mode<synchronous>, transform_indices = @transform_4, window_bounds = array<i64: 1, 8>}, {transform_indices = @transform_5, window_bounds = array<i64: 8, 8>}]} {
    %c0 = arith.constant 0 : index
    %c0_0 = arith.constant 0 : index
    %0 = vector.load %arg1[%c0, %c0_0] : memref<8x768xf32, #tpu.memory_space<vmem>>, vector<8x768xf32>
    %c0_1 = arith.constant 0 : index
    %c0_2 = arith.constant 0 : index
    %1 = vector.load %arg2[%c0_1, %c0_2] : memref<768x64xf32, #tpu.memory_space<vmem>>, vector<768x64xf32>
    %cst = arith.constant dense<0.000000e+00> : vector<8x64xf32>
    %2 = tpu.matmul %0, %1, %cst {dimension_numbers = #tpu.dot_dimension_numbers<[1], [0], [0], [1], [0, 0, 1, 1], [], []>} : vector<8x768xf32>, vector<768x64xf32>, vector<8x64xf32> -> vector<8x64xf32>
    %c0_3 = arith.constant 0 : index
    %c0_4 = arith.constant 0 : index
    %3 = vector.load %arg3[%c0_3, %c0_4] : memref<1x64xf32, #tpu.memory_space<vmem>>, vector<1x64xf32>
    %4 = vector.broadcast %3 : vector<1x64xf32> to vector<8x64xf32>
    %5 = arith.cmpf olt, %2, %4 : vector<8x64xf32>
    %6 = arith.extui %5 : vector<8x64xi1> to vector<8x64xi32>
    %7 = arith.sitofp %6 : vector<8x64xi32> to vector<8x64xf32>
    %c0_5 = arith.constant 0 : index
    %c0_6 = arith.constant 0 : index
    %8 = vector.load %arg5[%c0_5, %c0_6] : memref<1x8xf32, #tpu.memory_space<vmem>>, vector<1x8xf32>
    %c0_7 = arith.constant 0 : index
    %c0_8 = arith.constant 0 : index
    %9 = vector.load %arg4[%c0_7, %c0_8] : memref<64x8xf32, #tpu.memory_space<vmem>>, vector<64x8xf32>
    %cst_9 = arith.constant dense<0.000000e+00> : vector<8x8xf32>
    %10 = tpu.matmul %7, %9, %cst_9 {dimension_numbers = #tpu.dot_dimension_numbers<[1], [0], [0], [1], [0, 0, 1, 1], [], []>} : vector<8x64xf32>, vector<64x8xf32>, vector<8x8xf32> -> vector<8x8xf32>
    %11 = vector.broadcast %8 : vector<1x8xf32> to vector<8x8xf32>
    %12 = arith.addf %11, %10 : vector<8x8xf32>
    %cst_10 = arith.constant dense<0xFF800000> : vector<8xf32>
    %13 = vector.multi_reduction <maximumf>, %12, %cst_10 [1] : vector<8x8xf32> to vector<8xf32>
    %14 = vector.shape_cast %13 : vector<8xf32> to vector<8x1xf32>
    %15 = vector.broadcast %14 : vector<8x1xf32> to vector<8x8xf32>
    %16 = arith.subf %12, %15 : vector<8x8xf32>
    %17 = math.exp %16 : vector<8x8xf32>
    %cst_11 = arith.constant dense<0.000000e+00> : vector<8xf32>
    %18 = vector.multi_reduction <add>, %17, %cst_11 [1] : vector<8x8xf32> to vector<8xf32>
    %19 = vector.shape_cast %18 : vector<8xf32> to vector<8x1xf32>
    %20 = vector.broadcast %19 : vector<8x1xf32> to vector<8x8xf32>
    %21 = arith.divf %17, %20 : vector<8x8xf32>
    %c0_12 = arith.constant 0 : index
    %c0_13 = arith.constant 0 : index
    %22 = vector.load %arg6[%c0_12, %c0_13] : memref<8x8xf32, #tpu.memory_space<vmem>>, vector<8x8xf32>
    tpu.vector_store %arg6[%c0_12, %c0_13], %21 {strides = array<i32>} : memref<8x8xf32, #tpu.memory_space<vmem>>, vector<8x8xf32>,
    return
  }
  func.func @transform_0(%arg0: i32) -> (i32, i32) {
    %c0_i32 = arith.constant 0 : i32
    %c0_i32_0 = arith.constant 0 : i32
    return %arg0, %c0_i32 : i32, i32
  }
  func.func @transform_1(%arg0: i32) -> (i32, i32) {
    %c0_i32 = arith.constant 0 : i32
    %c0_i32_0 = arith.constant 0 : i32
    %c0_i32_1 = arith.constant 0 : i32
    return %c0_i32, %c0_i32_0 : i32, i32
  }
  func.func @transform_2(%arg0: i32) -> (i32, i32) {
    %c0_i32 = arith.constant 0 : i32
    %c0_i32_0 = arith.constant 0 : i32
    %c0_i32_1 = arith.constant 0 : i32
    return %c0_i32, %c0_i32_0 : i32, i32
  }
  func.func @transform_3(%arg0: i32) -> (i32, i32) {
    %c0_i32 = arith.constant 0 : i32
    %c0_i32_0 = arith.constant 0 : i32
    %c0_i32_1 = arith.constant 0 : i32
    return %c0_i32, %c0_i32_0 : i32, i32
  }
  func.func @transform_4(%arg0: i32) -> (i32, i32) {
    %c0_i32 = arith.constant 0 : i32
    %c0_i32_0 = arith.constant 0 : i32
    %c0_i32_1 = arith.constant 0 : i32
    return %c0_i32, %c0_i32_0 : i32, i32
  }
  func.func @transform_5(%arg0: i32) -> (i32, i32) {
    %c0_i32 = arith.constant 0 : i32
    %c0_i32_0 = arith.constant 0 : i32
    return %arg0, %c0_i32 : i32, i32
  }
}

</mosaic_0001>

<llo_original>
// kernel: tpu_custom_call.1
$region0: #{tpu_custom_call.1}
  #allocation0 [shape = 'u32[]', space=smem, size = 0x4, offset = 0x4, fixed_abs, tag = 'smem constant byte address 0x4 - core index']
  #allocation1 [shape = 'u32[72,128]{1,0:T(1,128)}', space=vmem, size = 0x9000, scoped, tag = 'internal scratch']
  %s0 = inlined_call_operand.vmem [shape: f32[8,768], index: 0, kind: input, shape index: {}]
  %s1 = inlined_call_operand.vmem [shape: f32[768,64], index: 1, kind: input, shape index: {}]
  %s2 = inlined_call_operand.vmem [shape: f32[1,64], index: 2, kind: input, shape index: {}]
  %s3 = inlined_call_operand.vmem [shape: f32[64,8], index: 3, kind: input, shape index: {}]
  %s4 = inlined_call_operand.vmem [shape: f32[1,8], index: 4, kind: input, shape index: {}]
  %s5 = inlined_call_operand.hbm [shape: f32[8,8], index: 5, kind: output, shape index: {}]
  %s6 = sld [smem:[#allocation0]]
  $region30: #{tpu_custom_call.1} parent=0
    _
  %s8 = ssub.s32 1, %s6
  %s9 = scalar_select 0, %s8, %s6
  $region1: #{tpu_custom_call.1} parent=0
    #allocation2 [shape = 'u8[4096]{0}', space=vmem, size = 0x1000, scoped, tag = 'output window, operand 0, single buffered']
    #allocation3 [shape = 's32[1]{0}', space=sflag, size = 0x4, scoped, tag = 'scoped memory for tpu_custom_call.1']
    %10 = vsyncpa [#allocation3], 0
    // Predicated region
    $region2: #{tpu_custom_call.1} parent=1 // pred_check
      _
    $region3: #{tpu_custom_call.1} parent=1 // pred_check_branch
      %12 = sbr.rel (0) target = $region5
    $region4: #{tpu_custom_call.1} parent=1 // pred_region
      _
    $region5: #{tpu_custom_call.1} parent=1 // pred_fallthru
      _
    // Predicated region
    $region6: #{tpu_custom_call.1} parent=1 // pred_check
      _
    $region7: #{tpu_custom_call.1} parent=1 // pred_check_branch
      %14 = sbr.rel (0) target = $region9
    $region8: #{tpu_custom_call.1} parent=1 // pred_region
      _
    $region9: #{tpu_custom_call.1} parent=1 // pred_fallthru
      _
    // Predicated region
    $region10: #{tpu_custom_call.1} parent=1 // pred_check
      _
    $region11: #{tpu_custom_call.1} parent=1 // pred_check_branch
      %16 = sbr.rel (0) target = $region13
    $region12: #{tpu_custom_call.1} parent=1 // pred_region
      _
    $region13: #{tpu_custom_call.1} parent=1 // pred_fallthru
      _
    // Predicated region
    $region14: #{tpu_custom_call.1} parent=1 // pred_check
      _
    $region15: #{tpu_custom_call.1} parent=1 // pred_check_branch
      %18 = sbr.rel (0) target = $region17
    $region16: #{tpu_custom_call.1} parent=1 // pred_region
      _
    $region17: #{tpu_custom_call.1} parent=1 // pred_fallthru
      _
    // Predicated region
    $region18: #{tpu_custom_call.1} parent=1 // pred_check
      _
    $region19: #{tpu_custom_call.1} parent=1 // pred_check_branch
      %20 = sbr.rel (0) target = $region21
    $region20: #{tpu_custom_call.1} parent=1 // pred_region
      _
    $region21: #{tpu_custom_call.1} parent=1 // pred_fallthru
      _
    %v21 = vld [vmem:[%s0] sm:$0xff]
    %v22 = vld [vmem:[%s0 + $0x8] sm:$0xff]
    %v23 = vld [vmem:[%s0 + $0x10] sm:$0xff]
    %v24 = vld [vmem:[%s0 + $0x18] sm:$0xff]
    %v25 = vld [vmem:[%s0 + $0x20] sm:$0xff]
    %v26 = vld [vmem:[%s0 + $0x28] sm:$0xff]
    %v27 = vld [vmem:[%s1] sm:$0xff]
    %v28 = vld [vmem:[%s1 + $0x8] sm:$0xff]
    %v29 = vld [vmem:[%s1 + $0x10] sm:$0xff]
    %v30 = vld [vmem:[%s1 + $0x18] sm:$0xff]
    %v31 = vld [vmem:[%s1 + $0x20] sm:$0xff]
    %v32 = vld [vmem:[%s1 + $0x28] sm:$0xff]
    %v33 = vld [vmem:[%s1 + $0x30] sm:$0xff]
    %v34 = vld [vmem:[%s1 + $0x38] sm:$0xff]
    %v35 = vld [vmem:[%s1 + $0x40] sm:$0xff]
    %v36 = vld [vmem:[%s1 + $0x48] sm:$0xff]
    %v37 = vld [vmem:[%s1 + $0x50] sm:$0xff]
    %v38 = vld [vmem:[%s1 + $0x58] sm:$0xff]
    %v39 = vld [vmem:[%s1 + $0x60] sm:$0xff]
    %v40 = vld [vmem:[%s1 + $0x68] sm:$0xff]
    %v41 = vld [vmem:[%s1 + $0x70] sm:$0xff]
    %v42 = vld [vmem:[%s1 + $0x78] sm:$0xff]
    %v43 = vld [vmem:[%s1 + $0x80] sm:$0xff]
    %v44 = vld [vmem:[%s1 + $0x88] sm:$0xff]
    %v45 = vld [vmem:[%s1 + $0x90] sm:$0xff]
    %v46 = vld [vmem:[%s1 + $0x98] sm:$0xff]
    %v47 = vld [vmem:[%s1 + $0xa0] sm:$0xff]
    %v48 = vld [vmem:[%s1 + $0xa8] sm:$0xff]
    %v49 = vld [vmem:[%s1 + $0xb0] sm:$0xff]
    %v50 = vld [vmem:[%s1 + $0xb8] sm:$0xff]
    %v51 = vld [vmem:[%s1 + $0xc0] sm:$0xff]
    %v52 = vld [vmem:[%s1 + $0xc8] sm:$0xff]
    %v53 = vld [vmem:[%s1 + $0xd0] sm:$0xff]
    %v54 = vld [vmem:[%s1 + $0xd8] sm:$0xff]
    %v55 = vld [vmem:[%s1 + $0xe0] sm:$0xff]
    %v56 = vld [vmem:[%s1 + $0xe8] sm:$0xff]
    %v57 = vld [vmem:[%s1 + $0xf0] sm:$0xff]
    %v58 = vld [vmem:[%s1 + $0xf8] sm:$0xff]
    %v59 = vld [vmem:[%s1 + $0x100] sm:$0xff]
    %v60 = vld [vmem:[%s1 + $0x108] sm:$0xff]
    %v61 = vld [vmem:[%s1 + $0x110] sm:$0xff]
    %v62 = vld [vmem:[%s1 + $0x118] sm:$0xff]
    %v63 = vld [vmem:[%s1 + $0x120] sm:$0xff]
    %v64 = vld [vmem:[%s1 + $0x128] sm:$0xff]
    %v65 = vld [vmem:[%s1 + $0x130] sm:$0xff]
    %v66 = vld [vmem:[%s1 + $0x138] sm:$0xff]
    %v67 = vld [vmem:[%s1 + $0x140] sm:$0xff]
    %v68 = vld [vmem:[%s1 + $0x148] sm:$0xff]
    %v69 = vld [vmem:[%s1 + $0x150] sm:$0xff]
    %v70 = vld [vmem:[%s1 + $0x158] sm:$0xff]
    %v71 = vld [vmem:[%s1 + $0x160] sm:$0xff]
    %v72 = vld [vmem:[%s1 + $0x168] sm:$0xff]
    %v73 = vld [vmem:[%s1 + $0x170] sm:$0xff]
    %v74 = vld [vmem:[%s1 + $0x178] sm:$0xff]
    %v75 = vld [vmem:[%s1 + $0x180] sm:$0xff]
    %v76 = vld [vmem:[%s1 + $0x188] sm:$0xff]
    %v77 = vld [vmem:[%s1 + $0x190] sm:$0xff]
    %v78 = vld [vmem:[%s1 + $0x198] sm:$0xff]
    %v79 = vld [vmem:[%s1 + $0x1a0] sm:$0xff]
    %v80 = vld [vmem:[%s1 + $0x1a8] sm:$0xff]
    %v81 = vld [vmem:[%s1 + $0x1b0] sm:$0xff]
    %v82 = vld [vmem:[%s1 + $0x1b8] sm:$0xff]
    %v83 = vld [vmem:[%s1 + $0x1c0] sm:$0xff]
    %v84 = vld [vmem:[%s1 + $0x1c8] sm:$0xff]
    %v85 = vld [vmem:[%s1 + $0x1d0] sm:$0xff]
    %v86 = vld [vmem:[%s1 + $0x1d8] sm:$0xff]
    %v87 = vld [vmem:[%s1 + $0x1e0] sm:$0xff]
    %v88 = vld [vmem:[%s1 + $0x1e8] sm:$0xff]
    %v89 = vld [vmem:[%s1 + $0x1f0] sm:$0xff]
    %v90 = vld [vmem:[%s1 + $0x1f8] sm:$0xff]
    %v91 = vld [vmem:[%s1 + $0x200] sm:$0xff]
    %v92 = vld [vmem:[%s1 + $0x208] sm:$0xff]
    %v93 = vld [vmem:[%s1 + $0x210] sm:$0xff]
    %v94 = vld [vmem:[%s1 + $0x218] sm:$0xff]
    %v95 = vld [vmem:[%s1 + $0x220] sm:$0xff]
    %v96 = vld [vmem:[%s1 + $0x228] sm:$0xff]
    %v97 = vld [vmem:[%s1 + $0x230] sm:$0xff]
    %v98 = vld [vmem:[%s1 + $0x238] sm:$0xff]
    %v99 = vld [vmem:[%s1 + $0x240] sm:$0xff]
    %v100 = vld [vmem:[%s1 + $0x248] sm:$0xff]
    %v101 = vld [vmem:[%s1 + $0x250] sm:$0xff]
    %v102 = vld [vmem:[%s1 + $0x258] sm:$0xff]
    %v103 = vld [vmem:[%s1 + $0x260] sm:$0xff]
    %v104 = vld [vmem:[%s1 + $0x268] sm:$0xff]
    %v105 = vld [vmem:[%s1 + $0x270] sm:$0xff]
    %v106 = vld [vmem:[%s1 + $0x278] sm:$0xff]
    %v107 = vld [vmem:[%s1 + $0x280] sm:$0xff]
    %v108 = vld [vmem:[%s1 + $0x288] sm:$0xff]
    %v109 = vld [vmem:[%s1 + $0x290] sm:$0xff]
    %v110 = vld [vmem:[%s1 + $0x298] sm:$0xff]
    %v111 = vld [vmem:[%s1 + $0x2a0] sm:$0xff]
    %v112 = vld [vmem:[%s1 + $0x2a8] sm:$0xff]
    %v113 = vld [vmem:[%s1 + $0x2b0] sm:$0xff]
    %v114 = vld [vmem:[%s1 + $0x2b8] sm:$0xff]
    %v115 = vld [vmem:[%s1 + $0x2c0] sm:$0xff]
    %v116 = vld [vmem:[%s1 + $0x2c8] sm:$0xff]
    %v117 = vld [vmem:[%s1 + $0x2d0] sm:$0xff]
    %v118 = vld [vmem:[%s1 + $0x2d8] sm:$0xff]
    %v119 = vld [vmem:[%s1 + $0x2e0] sm:$0xff]
    %v120 = vld [vmem:[%s1 + $0x2e8] sm:$0xff]
    %v121 = vld [vmem:[%s1 + $0x2f0] sm:$0xff]
    %v122 = vld [vmem:[%s1 + $0x2f8] sm:$0xff]
    %123 = vmatpush.msra.mxu0 %v42
    %124 = vmatpush.msra.mxu0 %v41
    %125 = vmatpush.msra.mxu0 %v40
    %126 = vmatpush.msra.mxu0 %v39
    %127 = vmatpush.msra.mxu0 %v38
    %128 = vmatpush.msra.mxu0 %v37
    %129 = vmatpush.msra.mxu0 %v36
    %130 = vmatpush.msra.mxu0 %v35
    %131 = vmatpush.msra.mxu0 %v34
    %132 = vmatpush.msra.mxu0 %v33
    %133 = vmatpush.msra.mxu0 %v32
    %134 = vmatpush.msra.mxu0 %v31
    %135 = vmatpush.msra.mxu0 %v30
    %136 = vmatpush.msra.mxu0 %v29
    %137 = vmatpush.msra.mxu0 %v28
    %138 = vmatpush.msra.mxu0 %v27
    %139 = vmatmul.f32.gmra.mxu0 %v21
    %v140 = vpop.f32.mrf.mxu0
    %v141 = vadd.f32 0.0, %v140
    %142 = vdwg.mxu0
    %143 = vmatpush.msra.mxu0 %v58
    %144 = vmatpush.msra.mxu0 %v57
    %145 = vmatpush.msra.mxu0 %v56
    %146 = vmatpush.msra.mxu0 %v55
    %147 = vmatpush.msra.mxu0 %v54
    %148 = vmatpush.msra.mxu0 %v53
    %149 = vmatpush.msra.mxu0 %v52
    %150 = vmatpush.msra.mxu0 %v51
    %151 = vmatpush.msra.mxu0 %v50
    %152 = vmatpush.msra.mxu0 %v49
    %153 = vmatpush.msra.mxu0 %v48
    %154 = vmatpush.msra.mxu0 %v47
    %155 = vmatpush.msra.mxu0 %v46
    %156 = vmatpush.msra.mxu0 %v45
    %157 = vmatpush.msra.mxu0 %v44
    %158 = vmatpush.msra.mxu0 %v43
    %159 = vmatmul.f32.gmra.mxu0 %v22
    %v160 = vpop.f32.mrf.mxu0
    %v161 = vadd.f32 %v141, %v160
    %162 = vdwg.mxu0
    %163 = vmatpush.msra.mxu0 %v74
    %164 = vmatpush.msra.mxu0 %v73
    %165 = vmatpush.msra.mxu0 %v72
    %166 = vmatpush.msra.mxu0 %v71
    %167 = vmatpush.msra.mxu0 %v70
    %168 = vmatpush.msra.mxu0 %v69
    %169 = vmatpush.msra.mxu0 %v68
    %170 = vmatpush.msra.mxu0 %v67
    %171 = vmatpush.msra.mxu0 %v66
    %172 = vmatpush.msra.mxu0 %v65
    %173 = vmatpush.msra.mxu0 %v64
    %174 = vmatpush.msra.mxu0 %v63
    %175 = vmatpush.msra.mxu0 %v62
    %176 = vmatpush.msra.mxu0 %v61
    %177 = vmatpush.msra.mxu0 %v60
    %178 = vmatpush.msra.mxu0 %v59
    %179 = vmatmul.f32.gmra.mxu0 %v23
    %v180 = vpop.f32.mrf.mxu0
    %v181 = vadd.f32 %v161, %v180
    %182 = vdwg.mxu0
    %183 = vmatpush.msra.mxu0 %v90
    %184 = vmatpush.msra.mxu0 %v89
    %185 = vmatpush.msra.mxu0 %v88
    %186 = vmatpush.msra.mxu0 %v87
    %187 = vmatpush.msra.mxu0 %v86
    %188 = vmatpush.msra.mxu0 %v85
    %189 = vmatpush.msra.mxu0 %v84
    %190 = vmatpush.msra.mxu0 %v83
    %191 = vmatpush.msra.mxu0 %v82
    %192 = vmatpush.msra.mxu0 %v81
    %193 = vmatpush.msra.mxu0 %v80
    %194 = vmatpush.msra.mxu0 %v79
    %195 = vmatpush.msra.mxu0 %v78
    %196 = vmatpush.msra.mxu0 %v77
    %197 = vmatpush.msra.mxu0 %v76
    %198 = vmatpush.msra.mxu0 %v75
    %199 = vmatmul.f32.gmra.mxu0 %v24
    %v200 = vpop.f32.mrf.mxu0
    %v201 = vadd.f32 %v181, %v200
    %202 = vdwg.mxu0
    %203 = vmatpush.msra.mxu0 %v106
    %204 = vmatpush.msra.mxu0 %v105
    %205 = vmatpush.msra.mxu0 %v104
    %206 = vmatpush.msra.mxu0 %v103
    %207 = vmatpush.msra.mxu0 %v102
    %208 = vmatpush.msra.mxu0 %v101
    %209 = vmatpush.msra.mxu0 %v100
    %210 = vmatpush.msra.mxu0 %v99
    %211 = vmatpush.msra.mxu0 %v98
    %212 = vmatpush.msra.mxu0 %v97
    %213 = vmatpush.msra.mxu0 %v96
    %214 = vmatpush.msra.mxu0 %v95
    %215 = vmatpush.msra.mxu0 %v94
    %216 = vmatpush.msra.mxu0 %v93
    %217 = vmatpush.msra.mxu0 %v92
    %218 = vmatpush.msra.mxu0 %v91
    %219 = vmatmul.f32.gmra.mxu0 %v25
    %v220 = vpop.f32.mrf.mxu0
    %v221 = vadd.f32 %v201, %v220
    %222 = vdwg.mxu0
    %223 = vmatpush.msra.mxu0 %v122
    %224 = vmatpush.msra.mxu0 %v121
    %225 = vmatpush.msra.mxu0 %v120
    %226 = vmatpush.msra.mxu0 %v119
    %227 = vmatpush.msra.mxu0 %v118
    %228 = vmatpush.msra.mxu0 %v117
    %229 = vmatpush.msra.mxu0 %v116
    %230 = vmatpush.msra.mxu0 %v115
    %231 = vmatpush.msra.mxu0 %v114
    %232 = vmatpush.msra.mxu0 %v113
    %233 = vmatpush.msra.mxu0 %v112
    %234 = vmatpush.msra.mxu0 %v111
    %235 = vmatpush.msra.mxu0 %v110
    %236 = vmatpush.msra.mxu0 %v109
    %237 = vmatpush.msra.mxu0 %v108
    %238 = vmatpush.msra.mxu0 %v107
    %239 = vmatmul.f32.gmra.mxu0 %v26
    %v240 = vpop.f32.mrf.mxu0
    %v241 = vadd.f32 %v221, %v240
    %242 = vdwg.mxu0
    %v243 = vld [vmem:[%s2] sm:$0x1]
    %v245 = vperm.slane %v243, 0
    %vm247 = vcmp.lt.f32.partialorder %v241, %v245
    %v248 = vsel %vm247, 1, 0
    %v249 = vcvt.s32.f32 %v248
    %v250 = vld [vmem:[%s4] sm:$0x1]
    %v251 = vld [vmem:[%s3] sm:$0xff]
    %v252 = vld [vmem:[%s3 + $0x8] sm:$0xff]
    %v253 = vld [vmem:[%s3 + $0x10] sm:$0xff]
    %v254 = vld [vmem:[%s3 + $0x18] sm:$0xff]
    %v255 = vld [vmem:[%s3 + $0x20] sm:$0xff]
    %v256 = vld [vmem:[%s3 + $0x28] sm:$0xff]
    %v257 = vld [vmem:[%s3 + $0x30] sm:$0xff]
    %v258 = vld [vmem:[%s3 + $0x38] sm:$0xff]
    %vm259 = vcmask 523264
    %v261 = vsel %vm259, %v249, 0
    %263 = vmatpush.msra.mxu0 0.0
    %264 = vmatpush.msra.mxu0 0.0
    %265 = vmatpush.msra.mxu0 0.0
    %266 = vmatpush.msra.mxu0 0.0
    %267 = vmatpush.msra.mxu0 0.0
    %268 = vmatpush.msra.mxu0 0.0
    %269 = vmatpush.msra.mxu0 0.0
    %270 = vmatpush.msra.mxu0 0.0
    %271 = vmatpush.msra.mxu0 %v258
    %272 = vmatpush.msra.mxu0 %v257
    %273 = vmatpush.msra.mxu0 %v256
    %274 = vmatpush.msra.mxu0 %v255
    %275 = vmatpush.msra.mxu0 %v254
    %276 = vmatpush.msra.mxu0 %v253
    %277 = vmatpush.msra.mxu0 %v252
    %278 = vmatpush.msra.mxu0 %v251
    %279 = vmatmul.f32.gmra.mxu0 %v261
    %v280 = vpop.f32.mrf.mxu0
    %v281 = vadd.f32 0.0, %v280
    %282 = vdwg.mxu0
    %v284 = vperm.slane %v250, 0
    %v286 = vadd.f32 %v284, %v281
    %vm287 = vcmask 64512
    %v288 = vsel %vm287, %v286, -inf
    %289 = vmax.xlane.f32.xlu0 %v288
    %v290 = vpop.xlane.xlu0 %289
    %v291 = vsub.f32 %v286, %v290
    %v292 = vmul.f32 %v291, 1.442695
    %v293 = vpow.pop %v292
    %v294 = vsel %vm287, %v293, 0.0
    %295 = vadd.xlane.f32.xlu0 %v294
    %v296 = vpop.xlane.xlu0 %295
    %v297 = vrcp.pop %v296
    %v298 = vmul.f32 %v296, %v297
    %v299 = vsub.f32 1.0, %v298
    %v300 = vmul.f32 %v297, %v299
    %v301 = vadd.f32 %v297, %v300
    %vm302 = vweird.f32 %v296
    %vm303 = vweird.f32 %v297
    %vm304 = vmor %vm302, %vm303
    %v305 = vsel %vm304, %v297, %v301
    %v306 = vand.u32 2147483647, %v296
    %vm307 = vcmp.eq.f32.partialorder %v306, 8.507059e+37
    %v308 = vand.u32 %v296, 2147483648
    %v309 = vor.u32 1.1754944e-38, %v308
    %v310 = vsel %vm307, %v309, %v305
    %v311 = vmul.f32 %v293, %v310
    %312 = vst.msk [vmem:[#allocation2] sm:$0xff] %vm287, %v311
    // Predicated region
    $region22: #{tpu_custom_call.1} parent=1 // pred_check
      _
    $region23: #{tpu_custom_call.1} parent=1 // pred_check_branch
      %314 = sbr.rel (0) target = $region25
    $region24: #{tpu_custom_call.1} parent=1 // pred_region
      %316 = vsyncadd [#allocation3], 0
      %s318 = sshll.u32 [#allocation2], 4
      %s319 = int_to_ptr.vmem [resolvable:$true] %s318
      %s320 = sshll.u32 %s5, 4
      %s321 = int_to_ptr.hbm [resolvable:$true] %s320
      %323 = dma.vmem_to_hbm [thread:$0]  %s319, 128, %s321, [#allocation3]
    $region25: #{tpu_custom_call.1} parent=1 // pred_fallthru
      _
    // Predicated region
    $region26: #{tpu_custom_call.1} parent=1 // pred_check
      _
    $region27: #{tpu_custom_call.1} parent=1 // pred_check_branch
      %325 = sbr.rel (0) target = $region29
    $region28: #{tpu_custom_call.1} parent=1 // pred_region
      %327 = dma.done [#allocation3], 128
    $region29: #{tpu_custom_call.1} parent=1 // pred_fallthru
      _
    %328 = vsyncpa [#allocation3], 1

</llo_original>
